<compile_context>
chip_gen: v6e
topology: v6e:2x2x1
jax: 0.10.0
libtpu: 0.0.40
codegen_flags: <defaults>
</compile_context>

<pallas_src>
import math
import jax
import jax.numpy as jnp
from jax.experimental import pallas as pl
from jax.experimental.pallas import tpu as pltpu


def ca_layer_kernel(x_ref, w1_ref, b1_ref, pos_ref, w2_ref, b2_ref, o_ref):
    # x_ref  : (F, tile_c, HW)  native-layout slab: one batch n, channels [cb*tile_c, ...)
    # w1_ref : (Fr, F)          conv_1 weight (out, in), pre-scaled by 1/HW
    # b1_ref : (Fr, 1)
    # pos_ref: (Fr, tile_c)     channel positional embedding for this channel block
    # w2_ref : (F, Fr)          conv_2 weight (out, in)
    # b2_ref : (F, 1)
    # o_ref  : (F, tile_c, HW)

    # Global average pool over the spatial (lane) dim; 1/HW is folded into w1 -> plain sum.
    pooled = jnp.sum(x_ref[...], axis=-1, dtype=jnp.float32)                 # (F, tile_c)

    # conv_1 (1x1) + ReLU, then add the per-channel positional embedding.
    a1 = jnp.dot(w1_ref[...], pooled, preferred_element_type=jnp.float32)    # (Fr, tile_c)
    a1 = jnp.maximum(a1 + b1_ref[...], 0.0) + pos_ref[...]

    # conv_2 (1x1) + sigmoid (routes to the EUP slot).
    a2 = jnp.dot(w2_ref[...], a1, preferred_element_type=jnp.float32)        # (F, tile_c)
    a2 = jax.nn.sigmoid(a2 + b2_ref[...])

    # Channel-attention scaling. Re-read x_ref (cheap VMEM loads) instead of holding the
    # slab live across the math, and keep the multiply in the native dtype.
    o_ref[...] = x_ref[...] * a2.astype(o_ref.dtype)[:, :, None]


def _pick_tile_c(C, bytes_per_channel, target_bytes, n_batch):
    """Largest channel tile that (a) divides C, (b) is a multiple of 8 or == C,
    (c) keeps the x block under ~target_bytes, (d) prefers >= 2 grid steps (v7x megacore)."""
    cands = sorted({c for c in range(8, C + 1, 8) if C % c == 0} | {C})
    tile_c = cands[0]
    for c in cands:
        if c * bytes_per_channel <= target_bytes:
            tile_c = c
    if n_batch * (C // tile_c) < 2:  # try to keep both TensorCores busy on v7x
        for c in reversed(cands):
            if n_batch * (C // c) >= 2 and c * bytes_per_channel <= target_bytes:
                tile_c = c
                break
    return tile_c


def ca_layer_pallas(x, w1, b1, w2, b2, pos, *, tile_c=None, block_target_bytes=2 << 20):
    """x: (N, F, C, H, W) -> (N, F, C, H, W).

    w1: (Fr, F)  conv_1 weight (out, in);  b1: (Fr,)
    w2: (F, Fr)  conv_2 weight (out, in);  b2: (F,)
    pos: (C, Fr) channel positional embedding (chan_pos_embed squeezed).
    """
    N, F, C, H, W = x.shape
    Fr = w1.shape[0]
    HW = H * W

    # Free layout change only: merge the spatial dims (contiguous), no HBM transpose of x.
    x4 = x.reshape(N, F, C, HW)

    if tile_c is None:
        tile_c = _pick_tile_c(C, F * HW * x.dtype.itemsize, block_target_bytes, N)
    assert C % tile_c == 0 and (tile_c % 8 == 0 or tile_c == C), "invalid tile_c"
    num_cb = C // tile_c

    # Tiny trace-time parameter plumbing (weights stay in conv (out, in) layout).
    w1s = w1.astype(jnp.float32) / float(HW)          # fold the mean's 1/HW into conv_1
    b1c = b1.astype(jnp.float32).reshape(Fr, 1)
    w2f = w2.astype(jnp.float32)
    b2c = b2.astype(jnp.float32).reshape(F, 1)
    # pos_g[cb, r, j] = pos[cb*tile_c + j, r]  -> per-block (Fr, tile_c) lane-dense tile.
    pos_g = pos.astype(jnp.float32).T.reshape(Fr, num_cb, tile_c).transpose(1, 0, 2)

    grid = (N, num_cb)

    flops = int(2 * N * C * (Fr * F + F * Fr)          # two 1x1-conv matmuls
                + 2 * N * F * C * HW)                  # pooling sum + attention scaling
    transcendentals = int(N * C * F)                   # sigmoid
    bytes_accessed = int(
        2 * x4.size * x4.dtype.itemsize
        + (w1s.size + b1c.size + w2f.size + b2c.size + pos_g.size) * 4
    )

    out4 = pl.pallas_call(
        ca_layer_kernel,
        out_shape=jax.ShapeDtypeStruct((N, F, C, HW), x.dtype),
        grid_spec=pltpu.PrefetchScalarGridSpec(
            num_scalar_prefetch=0,
            grid=grid,
            in_specs=[
                pl.BlockSpec((pl.Squeezed(), F, tile_c, HW),
                             lambda n, cb: (n, 0, cb, 0)),           # x slab
                pl.BlockSpec((Fr, F), lambda n, cb: (0, 0)),          # w1 (full, VMEM-resident)
                pl.BlockSpec((Fr, 1), lambda n, cb: (0, 0)),          # b1
                pl.BlockSpec((pl.Squeezed(), Fr, tile_c),
                             lambda n, cb: (cb, 0, 0)),               # pos block
                pl.BlockSpec((F, Fr), lambda n, cb: (0, 0)),          # w2 (full)
                pl.BlockSpec((F, 1), lambda n, cb: (0, 0)),           # b2
            ],
            out_specs=pl.BlockSpec((pl.Squeezed(), F, tile_c, HW),
                                   lambda n, cb: (n, 0, cb, 0)),
        ),
        compiler_params=pltpu.CompilerParams(
            dimension_semantics=("parallel", "parallel"),
            vmem_limit_bytes=32 * 1024 * 1024,   # headroom on v5e; default on v6e/v7x
        ),
        cost_estimate=pl.CostEstimate(
            flops=flops,
            transcendentals=transcendentals,
            bytes_accessed=bytes_accessed,
        ),
    )(x4, w1s, b1c, pos_g, w2f, b2c)

    return out4.reshape(N, F, C, H, W)


def init_conv1x1_params(key, fan_in, fan_out, dtype=jnp.float32):
    # PyTorch Conv2d default init (kaiming-uniform a=sqrt(5) on a 1x1 kernel):
    # weight, bias ~ U(-1/sqrt(fan_in), 1/sqrt(fan_in)). Stored as (out, in) like Conv2d.
    kw, kb = jax.random.split(key)
    bound = 1.0 / math.sqrt(fan_in)
    w = jax.random.uniform(kw, (fan_out, fan_in), dtype, -bound, bound)
    b = jax.random.uniform(kb, (fan_out,), dtype, -bound, bound)
    return w, b


def ca_layer_reference(x, w1, b1, w2, b2, pos):
    # Pure-JAX reference mirroring the PyTorch forward.
    # w1: (Fr, F), b1: (Fr,), w2: (F, Fr), b2: (F,), pos: (C, Fr)
    pooled = jnp.mean(x, axis=(3, 4))                                        # (N, F, C)
    a1 = jnp.einsum("rf,nfc->nrc", w1, pooled) + b1[None, :, None]
    a1 = jnp.maximum(a1, 0.0) + pos.T[None, :, :]                            # (N, Fr, C)
    a2 = jax.nn.sigmoid(jnp.einsum("fr,nrc->nfc", w2, a1) + b2[None, :, None])
    return x * a2[:, :, :, None, None]


if __name__ == "__main__":
    # Small shapes consistent with the module:
    #   batch N=2, n_feats F=32, channels C=8, spatial 16x16, reduction=4
    N, F, C, H, W = 2, 32, 8, 16, 16
    reduction = 4
    Fr = F // reduction

    key = jax.random.PRNGKey(0)
    kx, k1, k2, kp = jax.random.split(key, 4)

    x = jax.random.normal(kx, (N, F, C, H, W), jnp.float32)
    w1, b1 = init_conv1x1_params(k1, F, Fr)        # (Fr, F), (Fr,)
    w2, b2 = init_conv1x1_params(k2, Fr, F)        # (F, Fr), (F,)
    pos = jax.random.normal(kp, (C, Fr), jnp.float32)   # chan_pos_embed (C, Fr, 1, 1)

    out = ca_layer_pallas(x, w1, b1, w2, b2, pos)
    out = jax.block_until_ready(out)

    ref = ca_layer_reference(x, w1, b1, w2, b2, pos)
    assert out.shape == (N, F, C, H, W)
    # f32 end-to-end; tolerance covers MXU default-precision accumulation order.
    assert jnp.allclose(out, ref, atol=1e-3, rtol=1e-3), "mismatch vs reference"

    print("KERNEL_OK")
</pallas_src>

<mosaic_0001>
module attributes {stable_mosaic.version = 11 : i64} {
  func.func @ca_layer_kernel(%arg0: i32, %arg1: i32, %arg2: memref<1x32x8x256xf32, #tpu.memory_space<vmem>>, %arg3: memref<8x32xf32, #tpu.memory_space<vmem>>, %arg4: memref<8x1xf32, #tpu.memory_space<vmem>>, %arg5: memref<1x8x8xf32, #tpu.memory_space<vmem>>, %arg6: memref<32x8xf32, #tpu.memory_space<vmem>>, %arg7: memref<32x1xf32, #tpu.memory_space<vmem>>, %arg8: memref<1x32x8x256xf32, #tpu.memory_space<vmem>>) attributes {dimension_semantics = [#tpu.dimension_semantics<parallel>, #tpu.dimension_semantics<parallel>], iteration_bounds = array<i64: 2, 1>, scalar_prefetch = 0 : i64, scratch_operands = 0 : i64, tpu.core_type = #tpu.core_type<tc>, window_params = [{transform_indices = @transform_0, window_bounds = array<i64: 1, 32, 8, 256>}, {pipeline_mode = #tpu.pipeline_mode<synchronous>, transform_indices = @transform_1, window_bounds = array<i64: 8, 32>}, {pipeline_mode = #tpu.pipeline_mode<synchronous>, transform_indices = @transform_2, window_bounds = array<i64: 8, 1>}, {transform_indices = @transform_3, window_bounds = array<i64: 1, 8, 8>}, {pipeline_mode = #tpu.pipeline_mode<synchronous>, transform_indices = @transform_4, window_bounds = array<i64: 32, 8>}, {pipeline_mode = #tpu.pipeline_mode<synchronous>, transform_indices = @transform_5, window_bounds = array<i64: 32, 1>}, {transform_indices = @transform_6, window_bounds = array<i64: 1, 32, 8, 256>}]} {
    %c0 = arith.constant 0 : index
    %c0_0 = arith.constant 0 : index
    %c0_1 = arith.constant 0 : index
    %c0_2 = arith.constant 0 : index
    %0 = vector.load %arg2[%c0, %c0_0, %c0_1, %c0_2] : memref<1x32x8x256xf32, #tpu.memory_space<vmem>>, vector<1x32x8x256xf32>
    %1 = vector.shape_cast %0 : vector<1x32x8x256xf32> to vector<32x8x256xf32>
    %cst = arith.constant dense<0.000000e+00> : vector<32x8xf32>
    %2 = vector.multi_reduction <add>, %1, %cst [2] : vector<32x8x256xf32> to vector<32x8xf32>
    %c0_3 = arith.constant 0 : index
    %c0_4 = arith.constant 0 : index
    %3 = vector.load %arg3[%c0_3, %c0_4] : memref<8x32xf32, #tpu.memory_space<vmem>>, vector<8x32xf32>
    %cst_5 = arith.constant dense<0.000000e+00> : vector<8x8xf32>
    %4 = tpu.matmul %3, %2, %cst_5 {dimension_numbers = #tpu.dot_dimension_numbers<[1], [0], [0], [1], [0, 0, 1, 1], [], []>} : vector<8x32xf32>, vector<32x8xf32>, vector<8x8xf32> -> vector<8x8xf32>
    %c0_6 = arith.constant 0 : index
    %c0_7 = arith.constant 0 : index
    %5 = vector.load %arg4[%c0_6, %c0_7] : memref<8x1xf32, #tpu.memory_space<vmem>>, vector<8x1xf32>
    %6 = vector.broadcast %5 : vector<8x1xf32> to vector<8x8xf32>
    %7 = arith.addf %4, %6 : vector<8x8xf32>
    %cst_8 = arith.constant 0.000000e+00 : f32
    %8 = vector.broadcast %cst_8 : f32 to vector<8x8xf32>
    %9 = arith.maximumf %7, %8 : vector<8x8xf32>
    %c0_9 = arith.constant 0 : index
    %c0_10 = arith.constant 0 : index
    %c0_11 = arith.constant 0 : index
    %10 = vector.load %arg5[%c0_9, %c0_10, %c0_11] : memref<1x8x8xf32, #tpu.memory_space<vmem>>, vector<1x8x8xf32>
    %11 = vector.shape_cast %10 : vector<1x8x8xf32> to vector<8x8xf32>
    %12 = arith.addf %9, %11 : vector<8x8xf32>
    %c0_12 = arith.constant 0 : index
    %c0_13 = arith.constant 0 : index
    %13 = vector.load %arg6[%c0_12, %c0_13] : memref<32x8xf32, #tpu.memory_space<vmem>>, vector<32x8xf32>
    %cst_14 = arith.constant dense<0.000000e+00> : vector<32x8xf32>
    %14 = tpu.matmul %13, %12, %cst_14 {dimension_numbers = #tpu.dot_dimension_numbers<[1], [0], [0], [1], [0, 0, 1, 1], [], []>} : vector<32x8xf32>, vector<8x8xf32>, vector<32x8xf32> -> vector<32x8xf32>
    %c0_15 = arith.constant 0 : index
    %c0_16 = arith.constant 0 : index
    %15 = vector.load %arg7[%c0_15, %c0_16] : memref<32x1xf32, #tpu.memory_space<vmem>>, vector<32x1xf32>
    %16 = vector.broadcast %15 : vector<32x1xf32> to vector<32x8xf32>
    %17 = arith.addf %14, %16 : vector<32x8xf32>
    %18 = arith.negf %17 : vector<32x8xf32>
    %19 = math.exp %18 : vector<32x8xf32>
    %cst_17 = arith.constant 1.000000e+00 : f32
    %20 = vector.broadcast %cst_17 : f32 to vector<32x8xf32>
    %21 = arith.addf %20, %19 : vector<32x8xf32>
    %22 = arith.divf %20, %21 : vector<32x8xf32>
    %c0_18 = arith.constant 0 : index
    %c0_19 = arith.constant 0 : index
    %c0_20 = arith.constant 0 : index
    %c0_21 = arith.constant 0 : index
    %23 = vector.load %arg2[%c0_18, %c0_19, %c0_20, %c0_21] : memref<1x32x8x256xf32, #tpu.memory_space<vmem>>, vector<1x32x8x256xf32>
    %24 = vector.shape_cast %23 : vector<1x32x8x256xf32> to vector<32x8x256xf32>
    %25 = vector.shape_cast %22 : vector<32x8xf32> to vector<32x8x1xf32>
    %26 = vector.broadcast %25 : vector<32x8x1xf32> to vector<32x8x256xf32>
    %27 = arith.mulf %24, %26 : vector<32x8x256xf32>
    %c0_22 = arith.constant 0 : index
    %c0_23 = arith.constant 0 : index
    %c0_24 = arith.constant 0 : index
    %c0_25 = arith.constant 0 : index
    %28 = vector.load %arg8[%c0_22, %c0_23, %c0_24, %c0_25] : memref<1x32x8x256xf32, #tpu.memory_space<vmem>>, vector<1x32x8x256xf32>
    %29 = vector.shape_cast %28 : vector<1x32x8x256xf32> to vector<32x8x256xf32>
    %30 = vector.shape_cast %27 : vector<32x8x256xf32> to vector<1x32x8x256xf32>
    tpu.vector_store %arg8[%c0_22, %c0_23, %c0_24, %c0_25], %30 {strides = array<i32>} : memref<1x32x8x256xf32, #tpu.memory_space<vmem>>, vector<1x32x8x256xf32>,
    return
  }
  func.func @transform_0(%arg0: i32, %arg1: i32) -> (i32, i32, i32, i32) {
    %c0_i32 = arith.constant 0 : i32
    %c0_i32_0 = arith.constant 0 : i32
    %c0_i32_1 = arith.constant 0 : i32
    return %arg0, %c0_i32, %arg1, %c0_i32_0 : i32, i32, i32, i32
  }
  func.func @transform_1(%arg0: i32, %arg1: i32) -> (i32, i32) {
    %c0_i32 = arith.constant 0 : i32
    %c0_i32_0 = arith.constant 0 : i32
    %c0_i32_1 = arith.constant 0 : i32
    return %c0_i32, %c0_i32_0 : i32, i32
  }
  func.func @transform_2(%arg0: i32, %arg1: i32) -> (i32, i32) {
    %c0_i32 = arith.constant 0 : i32
    %c0_i32_0 = arith.constant 0 : i32
    %c0_i32_1 = arith.constant 0 : i32
    return %c0_i32, %c0_i32_0 : i32, i32
  }
  func.func @transform_3(%arg0: i32, %arg1: i32) -> (i32, i32, i32) {
    %c0_i32 = arith.constant 0 : i32
    %c0_i32_0 = arith.constant 0 : i32
    %c0_i32_1 = arith.constant 0 : i32
    return %arg1, %c0_i32, %c0_i32_0 : i32, i32, i32
  }
  func.func @transform_4(%arg0: i32, %arg1: i32) -> (i32, i32) {
    %c0_i32 = arith.constant 0 : i32
    %c0_i32_0 = arith.constant 0 : i32
    %c0_i32_1 = arith.constant 0 : i32
    return %c0_i32, %c0_i32_0 : i32, i32
  }
  func.func @transform_5(%arg0: i32, %arg1: i32) -> (i32, i32) {
    %c0_i32 = arith.constant 0 : i32
    %c0_i32_0 = arith.constant 0 : i32
    %c0_i32_1 = arith.constant 0 : i32
    return %c0_i32, %c0_i32_0 : i32, i32
  }
  func.func @transform_6(%arg0: i32, %arg1: i32) -> (i32, i32, i32, i32) {
    %c0_i32 = arith.constant 0 : i32
    %c0_i32_0 = arith.constant 0 : i32
    %c0_i32_1 = arith.constant 0 : i32
    return %arg0, %c0_i32, %arg1, %c0_i32_0 : i32, i32, i32, i32
  }
}

</mosaic_0001>

<llo_original>
// kernel: tpu_custom_call.1
$region0: #{tpu_custom_call.1}
  #allocation0 [shape = 'u32[]', space=smem, size = 0x4, offset = 0x4, fixed_abs, tag = 'smem constant byte address 0x4 - core index']
  #allocation1 [shape = 'u32[144,128]{1,0:T(1,128)}', space=vmem, size = 0x12000, scoped, tag = 'internal scratch']
  %s0 = inlined_call_operand.hbm [shape: f32[2,32,8,256], index: 0, kind: input, shape index: {}]
  %s1 = inlined_call_operand.vmem [shape: f32[8,32], index: 1, kind: input, shape index: {}]
  %s2 = inlined_call_operand.vmem [shape: f32[8,1], index: 2, kind: input, shape index: {}]
  %s3 = inlined_call_operand.vmem [shape: f32[1,8,8], index: 3, kind: input, shape index: {}]
  %s4 = inlined_call_operand.vmem [shape: f32[32,8], index: 4, kind: input, shape index: {}]
  %s5 = inlined_call_operand.vmem [shape: f32[32,1], index: 5, kind: input, shape index: {}]
  %s6 = inlined_call_operand.hbm [shape: f32[2,32,8,256], index: 6, kind: output, shape index: {}]
  %s7 = sld [smem:[#allocation0]]
  $region61: #{tpu_custom_call.1} parent=0
    _
  %s9 = ssub.s32 1, %s7
  %s10 = scalar_select 0, %s9, %s7
  $region1: #{tpu_custom_call.1} parent=0
    #allocation2 [shape = 'u8[524288]{0}', space=vmem, size = 0x80000, scoped, tag = 'input window, operand 0']
    #allocation3 [shape = 's32[2]{0}', space=sflag, size = 0x8, scoped, tag = 'scoped memory for tpu_custom_call.1']
    #allocation4 [shape = 's32[2]{0}', space=sflag, size = 0x8, scoped, tag = 'scoped memory for tpu_custom_call.1']
    #allocation5 [shape = 'u8[524288]{0}', space=vmem, size = 0x80000, scoped, tag = 'output window, operand 0']
    %11 = vsyncpa [#allocation3], 0
    %s12 = scalar_lea.sflag [#allocation3], 1
    %13 = vsyncpa %s12, 0
    %14 = vsyncpa [#allocation4], 0
    %s15 = scalar_lea.sflag [#allocation4], 1
    %16 = vsyncpa %s15, 0
    loop: start=0, step=1, limit=4
    $region2: #{tpu_custom_call.1} parent=1 // loop_pre_header
      _
    $region3: #{tpu_custom_call.1} parent=1 // loop_header
      %s18 = sphi 0, %s22
      %p19 = scmp.ge.s32.totalorder %s18, 4
      %s25 = sphi 0, %s37
      %s26 = sphi 0, %s33
      %s27 = sphi 0, %s25
      %s28 = sphi 0, %s26
      %s29 = sphi 0, %s27
      %s30 = sphi 0, %s28
      %s42 = sphi 0, %s44
      %s45 = sphi 0, %s42
      %s46 = sphi 0, %s45
      %s62 = sphi 0, %s46
      %s66 = sphi 0, %s66
      %s68 = sphi 0, %s66
      %s69 = sphi 0, %s68
      %s83 = sphi 0, %s69
      %s87 = sphi 0, %s87
      %s89 = sphi 0, %s87
      %s90 = sphi 0, %s89
      %s104 = sphi 0, %s90
      %s110 = sphi 0, %s112
      %s113 = sphi 0, %s110
      %s114 = sphi 0, %s113
      %s130 = sphi 0, %s114
      %s134 = sphi 0, %s134
      %s136 = sphi 0, %s134
      %s137 = sphi 0, %s136
      %s151 = sphi 0, %s137
      %s155 = sphi 0, %s155
      %s157 = sphi 0, %s155
      %s158 = sphi 0, %s157
      %s172 = sphi 0, %s158
      %s180 = sphi 0, %s182
      %s183 = sphi 0, %s180
      %s184 = sphi 0, %s183
      %s200 = sphi 0, %s184
    $region4: #{tpu_custom_call.1} parent=1 // loop_header_branch
      %21 = sbr.rel (%p19) target = $region8
    $region5: #{tpu_custom_call.1} parent=1 // loop_body
      %s23 = ssub.s32 %s18, 1
      %s24 = ssub.s32 %s18, 2
      %s31 = sadd.s32 1, %s26
      %p32 = scmp.ge.s32.totalorder %s31, 1
      %s33 = scalar_select %p32, 0, %s31
      %s34 = sadd.s32 1, %s25
      %s35 = scalar_select %p32, %s34, %s25
      %p36 = scmp.ge.s32.totalorder %s35, 2
      %s37 = scalar_select %p36, 0, %s35
      %s38 = ssub.s32 %s25, %s37
      %s39 = ssub.s32 %s26, %s33
      %s40 = sor.u32 %s38, %s39
      %p41 = scmp.eq.s32.totalorder %s40, 0
      %s43 = sadd.s32 %s42, 1
      %s44 = scalar_select %p41, %s42, %s43
      %p47 = pneg %p41
      %p48 = scmp.eq.s32.totalorder %s18, 1
      %p49 = por %p47, %p48
      %p50 = scmp.ne.s32.totalorder %s42, %s45
      %p51 = scmp.eq.s32.totalorder %s18, 0
      %p52 = por %p50, %p51
      %p53 = scmp.ne.s32.totalorder %s42, %s45
      %p54 = scmp.eq.s32.totalorder %s23, 1
      %p55 = por %p53, %p54
      %p56 = scmp.ne.s32.totalorder %s45, %s46
      %p57 = scmp.eq.s32.totalorder %s23, 0
      %p58 = por %p56, %p57
      %p59 = scmp.ne.s32.totalorder %s45, %s46
      %p60 = scmp.eq.s32.totalorder %s24, 1
      %p61 = por %p59, %p60
      %p63 = scmp.ne.s32.totalorder %s46, %s62
      %p64 = scmp.eq.s32.totalorder %s24, 0
      %p65 = por %p63, %p64
      %s67 = sadd.s32 %s66, 1
      %p70 = scmp.eq.s32.totalorder %s18, 1
      %p71 = scmp.ne.s32.totalorder %s66, %s68
      %p72 = scmp.eq.s32.totalorder %s18, 0
      %p73 = por %p71, %p72
      %p74 = scmp.ne.s32.totalorder %s66, %s68
      %p75 = scmp.eq.s32.totalorder %s23, 1
      %p76 = por %p74, %p75
      %p77 = scmp.ne.s32.totalorder %s68, %s69
      %p78 = scmp.eq.s32.totalorder %s23, 0
      %p79 = por %p77, %p78
      %p80 = scmp.ne.s32.totalorder %s68, %s69
      %p81 = scmp.eq.s32.totalorder %s24, 1
      %p82 = por %p80, %p81
      %p84 = scmp.ne.s32.totalorder %s69, %s83
      %p85 = scmp.eq.s32.totalorder %s24, 0
      %p86 = por %p84, %p85
      %s88 = sadd.s32 %s87, 1
      %p91 = scmp.eq.s32.totalorder %s18, 1
      %p92 = scmp.ne.s32.totalorder %s87, %s89
      %p93 = scmp.eq.s32.totalorder %s18, 0
      %p94 = por %p92, %p93
      %p95 = scmp.ne.s32.totalorder %s87, %s89
      %p96 = scmp.eq.s32.totalorder %s23, 1
      %p97 = por %p95, %p96
      %p98 = scmp.ne.s32.totalorder %s89, %s90
      %p99 = scmp.eq.s32.totalorder %s23, 0
      %p100 = por %p98, %p99
      %p101 = scmp.ne.s32.totalorder %s89, %s90
      %p102 = scmp.eq.s32.totalorder %s24, 1
      %p103 = por %p101, %p102
      %p105 = scmp.ne.s32.totalorder %s90, %s104
      %p106 = scmp.eq.s32.totalorder %s24, 0
      %p107 = por %p105, %p106
      %s108 = ssub.s32 %s26, %s33
      %p109 = scmp.eq.s32.totalorder %s108, 0
      %s111 = sadd.s32 %s110, 1
      %s112 = scalar_select %p109, %s110, %s111
      %p115 = pneg %p109
      %p116 = scmp.eq.s32.totalorder %s18, 1
      %p117 = por %p115, %p116
      %p118 = scmp.ne.s32.totalorder %s110, %s113
      %p119 = scmp.eq.s32.totalorder %s18, 0
      %p120 = por %p118, %p119
      %p121 = scmp.ne.s32.totalorder %s110, %s113
      %p122 = scmp.eq.s32.totalorder %s23, 1
      %p123 = por %p121, %p122
      %p124 = scmp.ne.s32.totalorder %s113, %s114
      %p125 = scmp.eq.s32.totalorder %s23, 0
      %p126 = por %p124, %p125
      %p127 = scmp.ne.s32.totalorder %s113, %s114
      %p128 = scmp.eq.s32.totalorder %s24, 1
      %p129 = por %p127, %p128
      %p131 = scmp.ne.s32.totalorder %s114, %s130
      %p132 = scmp.eq.s32.totalorder %s24, 0
      %p133 = por %p131, %p132
      %s135 = sadd.s32 %s134, 1
      %p138 = scmp.eq.s32.totalorder %s18, 1
      %p139 = scmp.ne.s32.totalorder %s134, %s136
      %p140 = scmp.eq.s32.totalorder %s18, 0
      %p141 = por %p139, %p140
      %p142 = scmp.ne.s32.totalorder %s134, %s136
      %p143 = scmp.eq.s32.totalorder %s23, 1
      %p144 = por %p142, %p143
      %p145 = scmp.ne.s32.totalorder %s136, %s137
      %p146 = scmp.eq.s32.totalorder %s23, 0
      %p147 = por %p145, %p146
      %p148 = scmp.ne.s32.totalorder %s136, %s137
      %p149 = scmp.eq.s32.totalorder %s24, 1
      %p150 = por %p148, %p149
      %p152 = scmp.ne.s32.totalorder %s137, %s151
      %p153 = scmp.eq.s32.totalorder %s24, 0
      %p154 = por %p152, %p153
      %s156 = sadd.s32 %s155, 1
      %p159 = scmp.eq.s32.totalorder %s18, 1
      %p160 = scmp.ne.s32.totalorder %s155, %s157
      %p161 = scmp.eq.s32.totalorder %s18, 0
      %p162 = por %p160, %p161
      %p163 = scmp.ne.s32.totalorder %s155, %s157
      %p164 = scmp.eq.s32.totalorder %s23, 1
      %p165 = por %p163, %p164
      %p166 = scmp.ne.s32.totalorder %s157, %s158
      %p167 = scmp.eq.s32.totalorder %s23, 0
      %p168 = por %p166, %p167
      %p169 = scmp.ne.s32.totalorder %s157, %s158
      %p170 = scmp.eq.s32.totalorder %s24, 1
      %p171 = por %p169, %p170
      %p173 = scmp.ne.s32.totalorder %s158, %s172
      %p174 = scmp.eq.s32.totalorder %s24, 0
      %p175 = por %p173, %p174
      %s176 = ssub.s32 %s25, %s37
      %s177 = ssub.s32 %s26, %s33
      %s178 = sor.u32 %s176, %s177
      %p179 = scmp.eq.s32.totalorder %s178, 0
      %s181 = sadd.s32 %s180, 1
      %s182 = scalar_select %p179, %s180, %s181
      %p185 = pneg %p179
      %p186 = scmp.eq.s32.totalorder %s18, 1
      %p187 = por %p185, %p186
      %p188 = scmp.ne.s32.totalorder %s180, %s183
      %p189 = scmp.eq.s32.totalorder %s18, 0
      %p190 = por %p188, %p189
      %p191 = scmp.ne.s32.totalorder %s180, %s183
      %p192 = scmp.eq.s32.totalorder %s23, 1
      %p193 = por %p191, %p192
      %p194 = scmp.ne.s32.totalorder %s183, %s184
      %p195 = scmp.eq.s32.totalorder %s23, 0
      %p196 = por %p194, %p195
      %p197 = scmp.ne.s32.totalorder %s183, %s184
      %p198 = scmp.eq.s32.totalorder %s24, 1
      %p199 = por %p197, %p198
      %p201 = scmp.ne.s32.totalorder %s184, %s200
      %p202 = scmp.eq.s32.totalorder %s24, 0
      %p203 = por %p201, %p202
      %p204 = scmp.le.s32.totalorder 1, %s18
      %p205 = scmp.lt.s32.totalorder %s18, 3
      %p206 = pnand %p204, %p205
      %p207 = pneg %p206
      // Predicated region
      $region9: #{tpu_custom_call.1} parent=5 // pred_check
        _
      $region10: #{tpu_custom_call.1} parent=5 // pred_check_branch
        %209 = sbr.rel (%p206) target = $region12
      $region11: #{tpu_custom_call.1} parent=5 // pred_region
        %s210 = ssub.s32 %s18, 1
        // Predicated region
        $region13: #{tpu_custom_call.1} parent=11 // pred_check
          %p211 = pneg %p79
        $region14: #{tpu_custom_call.1} parent=11 // pred_check_branch
          %213 = sbr.rel (%p211) target = $region16
        $region15: #{tpu_custom_call.1} parent=11 // pred_region
          _
        $region16: #{tpu_custom_call.1} parent=11 // pred_fallthru
          _
        // Predicated region
        $region17: #{tpu_custom_call.1} parent=11 // pred_check
          %p214 = pneg %p100
        $region18: #{tpu_custom_call.1} parent=11 // pred_check_branch
          %216 = sbr.rel (%p214) target = $region20
        $region19: #{tpu_custom_call.1} parent=11 // pred_region
          _
        $region20: #{tpu_custom_call.1} parent=11 // pred_fallthru
          _
        // Predicated region
        $region21: #{tpu_custom_call.1} parent=11 // pred_check
          %p217 = pneg %p126
        $region22: #{tpu_custom_call.1} parent=11 // pred_check_branch
          %219 = sbr.rel (%p217) target = $region24
        $region23: #{tpu_custom_call.1} parent=11 // pred_region
          %p220 = scmp.lt.s32.totalorder %s28, 0
          %s221 = scalar_select %p220, %s28, 0
          %s222 = smul.addr %s221, 8
          %s223 = scalar_lea.vmem %s3, %s222
        $region24: #{tpu_custom_call.1} parent=11 // pred_fallthru
          _
        // Predicated region
        $region25: #{tpu_custom_call.1} parent=11 // pred_check
          %p224 = pneg %p147
        $region26: #{tpu_custom_call.1} parent=11 // pred_check_branch
          %226 = sbr.rel (%p224) target = $region28
        $region27: #{tpu_custom_call.1} parent=11 // pred_region
          _
        $region28: #{tpu_custom_call.1} parent=11 // pred_fallthru
          _
        // Predicated region
        $region29: #{tpu_custom_call.1} parent=11 // pred_check
          %p227 = pneg %p168
        $region30: #{tpu_custom_call.1} parent=11 // pred_check_branch
          %229 = sbr.rel (%p227) target = $region32
        $region31: #{tpu_custom_call.1} parent=11 // pred_region
          _
        $region32: #{tpu_custom_call.1} parent=11 // pred_fallthru
          _
      $region12: #{tpu_custom_call.1} parent=5 // pred_fallthru
        _
      %p230 = scmp.lt.s32.totalorder %s18, 2
      // Predicated region
      $region33: #{tpu_custom_call.1} parent=5 // pred_check
        %p231 = pneg %p230
      $region34: #{tpu_custom_call.1} parent=5 // pred_check_branch
        %233 = sbr.rel (%p231) target = $region36
      $region35: #{tpu_custom_call.1} parent=5 // pred_region
        // Predicated region
        $region37: #{tpu_custom_call.1} parent=35 // pred_check
          %p234 = pneg %p52
        $region38: #{tpu_custom_call.1} parent=35 // pred_check_branch
          %236 = sbr.rel (%p234) target = $region40
        $region39: #{tpu_custom_call.1} parent=35 // pred_region
          %s237 = sand.u32 %s42, 1
          %s238 = scalar_lea.sflag [#allocation3], %s237
          %s239 = sand.u32 %s42, 1
          %s240 = smul.addr %s239, 512
          %s241 = scalar_lea.vmem [#allocation2], %s240
          %s243 = ssub.s32 8192, 8192
          %244 = vsyncadd %s238, %s243
          %s245 = smul.addr %s26, 2
          %s246 = smul.addr %s25, 64
          %s247 = sadd.s32 %s245, %s246
          %s248 = smul.addr %s247, 128
          %s249 = scalar_lea.hbm %s0, %s248
          %s250 = sshll.u32 %s241, 4
          %s251 = int_to_ptr.vmem [resolvable:$true] %s250
          %256 = dma.hbm_to_vmem [thread:$0]  %s249, 8192, %s251, %s238, 256, 256, 16
        $region40: #{tpu_custom_call.1} parent=35 // pred_fallthru
          _
      $region36: #{tpu_custom_call.1} parent=5 // pred_fallthru
        _
      %p257 = scmp.le.s32.totalorder 1, %s18
      %p258 = scmp.lt.s32.totalorder %s18, 3
      %p259 = pnand %p257, %p258
      %p260 = pneg %p259
      // Predicated region
      $region41: #{tpu_custom_call.1} parent=5 // pred_check
        _
      $region42: #{tpu_custom_call.1} parent=5 // pred_check_branch
        %262 = sbr.rel (%p259) target = $region44
      $region43: #{tpu_custom_call.1} parent=5 // pred_region
        %s263 = ssub.s32 %s18, 1
        %s264 = sand.u32 %s45, 1
        %s265 = scalar_lea.sflag [#allocation3], %s264
        %s266 = sand.u32 %s45, 1
        %s267 = smul.addr %s266, 512
        %s268 = scalar_lea.vmem [#allocation2], %s267
        // Predicated region
        $region45: #{tpu_custom_call.1} parent=43 // pred_check
          %p269 = pneg %p58
        $region46: #{tpu_custom_call.1} parent=43 // pred_check_branch
          %271 = sbr.rel (%p269) target = $region48
        $region47: #{tpu_custom_call.1} parent=43 // pred_region
          %272 = dma.done %s265, 8192
        $region48: #{tpu_custom_call.1} parent=43 // pred_fallthru
          _
        %s273 = sand.u32 %s45, 1
        %s274 = scalar_lea.sflag [#allocation3], %s273
        %s275 = sand.u32 %s45, 1
        %s276 = smul.addr %s275, 512
        %s277 = scalar_lea.vmem [#allocation2], %s276
        %p278 = pneg %p58
        %p279 = pneg %p55
        %p280 = pneg %p79
        %p281 = pneg %p76
        %p282 = pneg %p100
        %p283 = pneg %p97
        %p284 = scmp.lt.s32.totalorder %s28, 0
        %s285 = scalar_select %p284, %s28, 0
        %s286 = smul.addr %s285, 8
        %s287 = scalar_lea.vmem %s3, %s286
        %p288 = pneg %p126
        %p289 = pneg %p123
        %p290 = pneg %p147
        %p291 = pneg %p144
        %p292 = pneg %p168
        %p293 = pneg %p165
        %p294 = pneg %p196
        %p295 = pneg %p193
        %s296 = sand.u32 %s183, 1
        %s297 = scalar_lea.sflag [#allocation4], %s296
        %s298 = sand.u32 %s183, 1
        %s299 = smul.addr %s298, 512
        %s300 = scalar_lea.vmem [#allocation5], %s299
        %p301 = scmp.lt.s32.totalorder %s28, 0
        %s302 = scalar_select %p301, %s28, 0
        %s303 = smul.addr %s302, 8
        %s304 = scalar_lea.vmem %s3, %s303
        %v305 = vld [vmem:[%s268] sm:$0xff]
        %v306 = vld [vmem:[%s268 + $0x8] sm:$0xff]
        %v307 = vld [vmem:[%s268 + $0x10] sm:$0xff]
        %v308 = vld [vmem:[%s268 + $0x18] sm:$0xff]
        %v309 = vld [vmem:[%s268 + $0x20] sm:$0xff]
        %v310 = vld [vmem:[%s268 + $0x28] sm:$0xff]
        %v311 = vld [vmem:[%s268 + $0x30] sm:$0xff]
        %v312 = vld [vmem:[%s268 + $0x38] sm:$0xff]
        %v313 = vld [vmem:[%s268 + $0x40] sm:$0xff]
        %v314 = vld [vmem:[%s268 + $0x48] sm:$0xff]
        %v315 = vld [vmem:[%s268 + $0x50] sm:$0xff]
        %v316 = vld [vmem:[%s268 + $0x58] sm:$0xff]
        %v317 = vld [vmem:[%s268 + $0x60] sm:$0xff]
        %v318 = vld [vmem:[%s268 + $0x68] sm:$0xff]
        %v319 = vld [vmem:[%s268 + $0x70] sm:$0xff]
        %v320 = vld [vmem:[%s268 + $0x78] sm:$0xff]
        %v321 = vld [vmem:[%s268 + $0x80] sm:$0xff]
        %v322 = vld [vmem:[%s268 + $0x88] sm:$0xff]
        %v323 = vld [vmem:[%s268 + $0x90] sm:$0xff]
        %v324 = vld [vmem:[%s268 + $0x98] sm:$0xff]
        %v325 = vld [vmem:[%s268 + $0xa0] sm:$0xff]
        %v326 = vld [vmem:[%s268 + $0xa8] sm:$0xff]
        %v327 = vld [vmem:[%s268 + $0xb0] sm:$0xff]
        %v328 = vld [vmem:[%s268 + $0xb8] sm:$0xff]
        %v329 = vld [vmem:[%s268 + $0xc0] sm:$0xff]
        %v330 = vld [vmem:[%s268 + $0xc8] sm:$0xff]
        %v331 = vld [vmem:[%s268 + $0xd0] sm:$0xff]
        %v332 = vld [vmem:[%s268 + $0xd8] sm:$0xff]
        %v333 = vld [vmem:[%s268 + $0xe0] sm:$0xff]
        %v334 = vld [vmem:[%s268 + $0xe8] sm:$0xff]
        %v335 = vld [vmem:[%s268 + $0xf0] sm:$0xff]
        %v336 = vld [vmem:[%s268 + $0xf8] sm:$0xff]
        %v337 = vld [vmem:[%s268 + $0x100] sm:$0xff]
        %v338 = vld [vmem:[%s268 + $0x108] sm:$0xff]
        %v339 = vld [vmem:[%s268 + $0x110] sm:$0xff]
        %v340 = vld [vmem:[%s268 + $0x118] sm:$0xff]
        %v341 = vld [vmem:[%s268 + $0x120] sm:$0xff]
        %v342 = vld [vmem:[%s268 + $0x128] sm:$0xff]
        %v343 = vld [vmem:[%s268 + $0x130] sm:$0xff]
        %v344 = vld [vmem:[%s268 + $0x138] sm:$0xff]
        %v345 = vld [vmem:[%s268 + $0x140] sm:$0xff]
        %v346 = vld [vmem:[%s268 + $0x148] sm:$0xff]
        %v347 = vld [vmem:[%s268 + $0x150] sm:$0xff]
        %v348 = vld [vmem:[%s268 + $0x158] sm:$0xff]
        %v349 = vld [vmem:[%s268 + $0x160] sm:$0xff]
        %v350 = vld [vmem:[%s268 + $0x168] sm:$0xff]
        %v351 = vld [vmem:[%s268 + $0x170] sm:$0xff]
        %v352 = vld [vmem:[%s268 + $0x178] sm:$0xff]
        %v353 = vld [vmem:[%s268 + $0x180] sm:$0xff]
        %v354 = vld [vmem:[%s268 + $0x188] sm:$0xff]
        %v355 = vld [vmem:[%s268 + $0x190] sm:$0xff]
        %v356 = vld [vmem:[%s268 + $0x198] sm:$0xff]
        %v357 = vld [vmem:[%s268 + $0x1a0] sm:$0xff]
        %v358 = vld [vmem:[%s268 + $0x1a8] sm:$0xff]
        %v359 = vld [vmem:[%s268 + $0x1b0] sm:$0xff]
        %v360 = vld [vmem:[%s268 + $0x1b8] sm:$0xff]
        %v361 = vld [vmem:[%s268 + $0x1c0] sm:$0xff]
        %v362 = vld [vmem:[%s268 + $0x1c8] sm:$0xff]
        %v363 = vld [vmem:[%s268 + $0x1d0] sm:$0xff]
        %v364 = vld [vmem:[%s268 + $0x1d8] sm:$0xff]
        %v365 = vld [vmem:[%s268 + $0x1e0] sm:$0xff]
        %v366 = vld [vmem:[%s268 + $0x1e8] sm:$0xff]
        %v367 = vld [vmem:[%s268 + $0x1f0] sm:$0xff]
        %v368 = vld [vmem:[%s268 + $0x1f8] sm:$0xff]
        %v369 = vadd.f32 %v305, %v306
        %370 = vadd.xlane.f32.xlu0 %v369
        %v371 = vpop.xlane.xlu0 %370
        %v372 = vadd.f32 %v307, %v308
        %373 = vadd.xlane.f32.xlu0 %v372
        %v374 = vpop.xlane.xlu0 %373
        %v375 = vadd.f32 %v309, %v310
        %376 = vadd.xlane.f32.xlu0 %v375
        %v377 = vpop.xlane.xlu0 %376
        %v378 = vadd.f32 %v311, %v312
        %379 = vadd.xlane.f32.xlu0 %v378
        %v380 = vpop.xlane.xlu0 %379
        %v381 = vadd.f32 %v313, %v314
        %382 = vadd.xlane.f32.xlu0 %v381
        %v383 = vpop.xlane.xlu0 %382
        %v384 = vadd.f32 %v315, %v316
        %385 = vadd.xlane.f32.xlu0 %v384
        %v386 = vpop.xlane.xlu0 %385
        %v387 = vadd.f32 %v317, %v318
        %388 = vadd.xlane.f32.xlu0 %v387
        %v389 = vpop.xlane.xlu0 %388
        %v390 = vadd.f32 %v319, %v320
        %391 = vadd.xlane.f32.xlu0 %v390
        %v392 = vpop.xlane.xlu0 %391
        %v393 = vadd.f32 %v321, %v322
        %394 = vadd.xlane.f32.xlu0 %v393
        %v395 = vpop.xlane.xlu0 %394
        %v396 = vadd.f32 %v323, %v324
        %397 = vadd.xlane.f32.xlu0 %v396
        %v398 = vpop.xlane.xlu0 %397
        %v399 = vadd.f32 %v325, %v326
        %400 = vadd.xlane.f32.xlu0 %v399
        %v401 = vpop.xlane.xlu0 %400
        %v402 = vadd.f32 %v327, %v328
        %403 = vadd.xlane.f32.xlu0 %v402
        %v404 = vpop.xlane.xlu0 %403
        %v405 = vadd.f32 %v329, %v330
        %406 = vadd.xlane.f32.xlu0 %v405
        %v407 = vpop.xlane.xlu0 %406
        %v408 = vadd.f32 %v331, %v332
        %409 = vadd.xlane.f32.xlu0 %v408
        %v410 = vpop.xlane.xlu0 %409
        %v411 = vadd.f32 %v333, %v334
        %412 = vadd.xlane.f32.xlu0 %v411
        %v413 = vpop.xlane.xlu0 %412
        %v414 = vadd.f32 %v335, %v336
        %415 = vadd.xlane.f32.xlu0 %v414
        %v416 = vpop.xlane.xlu0 %415
        %v417 = vadd.f32 %v337, %v338
        %418 = vadd.xlane.f32.xlu0 %v417
        %v419 = vpop.xlane.xlu0 %418
        %v420 = vadd.f32 %v339, %v340
        %421 = vadd.xlane.f32.xlu0 %v420
        %v422 = vpop.xlane.xlu0 %421
        %v423 = vadd.f32 %v341, %v342
        %424 = vadd.xlane.f32.xlu0 %v423
        %v425 = vpop.xlane.xlu0 %424
        %v426 = vadd.f32 %v343, %v344
        %427 = vadd.xlane.f32.xlu0 %v426
        %v428 = vpop.xlane.xlu0 %427
        %v429 = vadd.f32 %v345, %v346
        %430 = vadd.xlane.f32.xlu0 %v429
        %v431 = vpop.xlane.xlu0 %430
        %v432 = vadd.f32 %v347, %v348
        %433 = vadd.xlane.f32.xlu0 %v432
        %v434 = vpop.xlane.xlu0 %433
        %v435 = vadd.f32 %v349, %v350
        %436 = vadd.xlane.f32.xlu0 %v435
        %v437 = vpop.xlane.xlu0 %436
        %v438 = vadd.f32 %v351, %v352
        %439 = vadd.xlane.f32.xlu0 %v438
        %v440 = vpop.xlane.xlu0 %439
        %v441 = vadd.f32 %v353, %v354
        %442 = vadd.xlane.f32.xlu0 %v441
        %v443 = vpop.xlane.xlu0 %442
        %v444 = vadd.f32 %v355, %v356
        %445 = vadd.xlane.f32.xlu0 %v444
        %v446 = vpop.xlane.xlu0 %445
        %v447 = vadd.f32 %v357, %v358
        %448 = vadd.xlane.f32.xlu0 %v447
        %v449 = vpop.xlane.xlu0 %448
        %v450 = vadd.f32 %v359, %v360
        %451 = vadd.xlane.f32.xlu0 %v450
        %v452 = vpop.xlane.xlu0 %451
        %v453 = vadd.f32 %v361, %v362
        %454 = vadd.xlane.f32.xlu0 %v453
        %v455 = vpop.xlane.xlu0 %454
        %v456 = vadd.f32 %v363, %v364
        %457 = vadd.xlane.f32.xlu0 %v456
        %v458 = vpop.xlane.xlu0 %457
        %v459 = vadd.f32 %v365, %v366
        %460 = vadd.xlane.f32.xlu0 %v459
        %v461 = vpop.xlane.xlu0 %460
        %v462 = vadd.f32 %v367, %v368
        %463 = vadd.xlane.f32.xlu0 %v462
        %v464 = vpop.xlane.xlu0 %463
        %v465 = vld [vmem:[%s1] sm:$0xff]
        %v466 = vld [vmem:[%s2] sm:$0xff]
        %468 = vset.pattern.permute.xlu0 0
        %469 = vperm.xlu0 %468, %v466
        %v470 = vpop.permute.xlu0 %469
        %v504 = vlaneseq
        %v505 = vand.u32 %v504, 127
        %v506 = vlaneseq
        %v507 = vshrl.u32 %v506, 7
        %v508 = vsub.s32 %v505, %v507
        %v509 = vrot.slane %v371, %v508
        %v510 = vlaneseq
        %v511 = vshrl.u32 %v510, 7
        %v512 = vsub.s32 %v505, %v511
        %v513 = vrot.slane %v374, %v512
        %v514 = vlaneseq
        %v515 = vshrl.u32 %v514, 7
        %v516 = vsub.s32 %v505, %v515
        %v517 = vrot.slane %v377, %v516
        %v518 = vlaneseq
        %v519 = vshrl.u32 %v518, 7
        %v520 = vsub.s32 %v505, %v519
        %v521 = vrot.slane %v380, %v520
        %v522 = vlaneseq
        %v523 = vshrl.u32 %v522, 7
        %v524 = vsub.s32 %v505, %v523
        %v525 = vrot.slane %v383, %v524
        %v526 = vlaneseq
        %v527 = vshrl.u32 %v526, 7
        %v528 = vsub.s32 %v505, %v527
        %v529 = vrot.slane %v386, %v528
        %v530 = vlaneseq
        %v531 = vshrl.u32 %v530, 7
        %v532 = vsub.s32 %v505, %v531
        %v533 = vrot.slane %v389, %v532
        %v534 = vlaneseq
        %v535 = vshrl.u32 %v534, 7
        %v536 = vsub.s32 %v505, %v535
        %v537 = vrot.slane %v392, %v536
        %v538 = vlaneseq
        %v539 = vshrl.u32 %v538, 7
        %v540 = vsub.s32 %v505, %v539
        %v541 = vrot.slane %v395, %v540
        %v542 = vlaneseq
        %v543 = vshrl.u32 %v542, 7
        %v544 = vsub.s32 %v505, %v543
        %v545 = vrot.slane %v398, %v544
        %v546 = vlaneseq
        %v547 = vshrl.u32 %v546, 7
        %v548 = vsub.s32 %v505, %v547
        %v549 = vrot.slane %v401, %v548
        %v550 = vlaneseq
        %v551 = vshrl.u32 %v550, 7
        %v552 = vsub.s32 %v505, %v551
        %v553 = vrot.slane %v404, %v552
        %v554 = vlaneseq
        %v555 = vshrl.u32 %v554, 7
        %v556 = vsub.s32 %v505, %v555
        %v557 = vrot.slane %v407, %v556
        %v558 = vlaneseq
        %v559 = vshrl.u32 %v558, 7
        %v560 = vsub.s32 %v505, %v559
        %v561 = vrot.slane %v410, %v560
        %v562 = vlaneseq
        %v563 = vshrl.u32 %v562, 7
        %v564 = vsub.s32 %v505, %v563
        %v565 = vrot.slane %v413, %v564
        %v566 = vlaneseq
        %v567 = vshrl.u32 %v566, 7
        %v568 = vsub.s32 %v505, %v567
        %v569 = vrot.slane %v416, %v568
        %v570 = vlaneseq
        %v571 = vshrl.u32 %v570, 7
        %v572 = vsub.s32 %v505, %v571
        %v573 = vrot.slane %v419, %v572
        %v574 = vlaneseq
        %v575 = vshrl.u32 %v574, 7
        %v576 = vsub.s32 %v505, %v575
        %v577 = vrot.slane %v422, %v576
        %v578 = vlaneseq
        %v579 = vshrl.u32 %v578, 7
        %v580 = vsub.s32 %v505, %v579
        %v581 = vrot.slane %v425, %v580
        %v582 = vlaneseq
        %v583 = vshrl.u32 %v582, 7
        %v584 = vsub.s32 %v505, %v583
        %v585 = vrot.slane %v428, %v584
        %v586 = vlaneseq
        %v587 = vshrl.u32 %v586, 7
        %v588 = vsub.s32 %v505, %v587
        %v589 = vrot.slane %v431, %v588
        %v590 = vlaneseq
        %v591 = vshrl.u32 %v590, 7
        %v592 = vsub.s32 %v505, %v591
        %v593 = vrot.slane %v434, %v592
        %v594 = vlaneseq
        %v595 = vshrl.u32 %v594, 7
        %v596 = vsub.s32 %v505, %v595
        %v597 = vrot.slane %v437, %v596
        %v598 = vlaneseq
        %v599 = vshrl.u32 %v598, 7
        %v600 = vsub.s32 %v505, %v599
        %v601 = vrot.slane %v440, %v600
        %v602 = vlaneseq
        %v603 = vshrl.u32 %v602, 7
        %v604 = vsub.s32 %v505, %v603
        %v605 = vrot.slane %v443, %v604
        %v606 = vlaneseq
        %v607 = vshrl.u32 %v606, 7
        %v608 = vsub.s32 %v505, %v607
        %v609 = vrot.slane %v446, %v608
        %v610 = vlaneseq
        %v611 = vshrl.u32 %v610, 7
        %v612 = vsub.s32 %v505, %v611
        %v613 = vrot.slane %v449, %v612
        %v614 = vlaneseq
        %v615 = vshrl.u32 %v614, 7
        %v616 = vsub.s32 %v505, %v615
        %v617 = vrot.slane %v452, %v616
        %v618 = vlaneseq
        %v619 = vshrl.u32 %v618, 7
        %v620 = vsub.s32 %v505, %v619
        %v621 = vrot.slane %v455, %v620
        %v622 = vlaneseq
        %v623 = vshrl.u32 %v622, 7
        %v624 = vsub.s32 %v505, %v623
        %v625 = vrot.slane %v458, %v624
        %v626 = vlaneseq
        %v627 = vshrl.u32 %v626, 7
        %v628 = vsub.s32 %v505, %v627
        %v629 = vrot.slane %v461, %v628
        %v630 = vlaneseq
        %v631 = vshrl.u32 %v630, 7
        %v632 = vsub.s32 %v505, %v631
        %v633 = vrot.slane %v464, %v632
        %vm634 = vcmask 1041409
        %v635 = vsel %vm634, %v513, %v509
        %vm636 = vcmask 1042434
        %v637 = vsel %vm636, %v517, %v635
        %vm638 = vcmask 1043459
        %v639 = vsel %vm638, %v521, %v637
        %vm640 = vcmask 1044484
        %v641 = vsel %vm640, %v525, %v639
        %vm642 = vcmask 1045509
        %v643 = vsel %vm642, %v529, %v641
        %vm644 = vcmask 1046534
        %v645 = vsel %vm644, %v533, %v643
        %vm646 = vcmask 1047559
        %v647 = vsel %vm646, %v537, %v645
        %v648 = vsel %vm634, %v545, %v541
        %v649 = vsel %vm636, %v549, %v648
        %v650 = vsel %vm638, %v553, %v649
        %v651 = vsel %vm640, %v557, %v650
        %v652 = vsel %vm642, %v561, %v651
        %v653 = vsel %vm644, %v565, %v652
        %v654 = vsel %vm646, %v569, %v653
        %v655 = vsel %vm634, %v577, %v573
        %v656 = vsel %vm636, %v581, %v655
        %v657 = vsel %vm638, %v585, %v656
        %v658 = vsel %vm640, %v589, %v657
        %v659 = vsel %vm642, %v593, %v658
        %v660 = vsel %vm644, %v597, %v659
        %v661 = vsel %vm646, %v601, %v660
        %v662 = vsel %vm634, %v609, %v605
        %v663 = vsel %vm636, %v613, %v662
        %v664 = vsel %vm638, %v617, %v663
        %v665 = vsel %vm640, %v621, %v664
        %v666 = vsel %vm642, %v625, %v665
        %v667 = vsel %vm644, %v629, %v666
        %v668 = vsel %vm646, %v633, %v667
        %vm673 = vcmask 261120
        %v675 = vsel %vm673, %v465, 0
        %677 = vmatprep.subr.mxu0 0.0
        %678 = vmatpush1.msra.mxu0 0.0
        %679 = vmatprep.subr.mxu0 0.0
        %680 = vmatpush1.msra.mxu0 0.0
        %681 = vmatprep.subr.mxu0 0.0
        %682 = vmatpush1.msra.mxu0 0.0
        %683 = vmatprep.subr.mxu0 0.0
        %684 = vmatpush1.msra.mxu0 0.0
        %685 = vmatprep.subr.mxu0 0.0
        %686 = vmatpush1.msra.mxu0 0.0
        %687 = vmatprep.subr.mxu0 0.0
        %688 = vmatpush1.msra.mxu0 0.0
        %689 = vmatprep.subr.mxu0 0.0
        %690 = vmatpush1.msra.mxu0 0.0
        %691 = vmatprep.subr.mxu0 0.0
        %692 = vmatpush1.msra.mxu0 0.0
        %693 = vmatprep.subr.mxu0 0.0
        %694 = vmatpush1.msra.mxu0 0.0
        %695 = vmatprep.subr.mxu0 0.0
        %696 = vmatpush1.msra.mxu0 0.0
        %697 = vmatprep.subr.mxu0 0.0
        %698 = vmatpush1.msra.mxu0 0.0
        %699 = vmatprep.subr.mxu0 0.0
        %700 = vmatpush1.msra.mxu0 0.0
        %701 = vmatprep.subr.mxu0 0.0
        %702 = vmatpush1.msra.mxu0 %v668
        %703 = vmatprep.subr.mxu0 0.0
        %704 = vmatpush1.msra.mxu0 %v661
        %705 = vmatprep.subr.mxu0 0.0
        %706 = vmatpush1.msra.mxu0 %v654
        %707 = vmatprep.subr.mxu0 0.0
        %708 = vmatpush1.msra.mxu0 %v647
        %709 = vmatprep.subr.mxu0 0.0
        %710 = vmatpush2.msra.mxu0 0.0
        %711 = vmatprep.subr.mxu0 0.0
        %712 = vmatpush2.msra.mxu0 0.0
        %713 = vmatprep.subr.mxu0 0.0
        %714 = vmatpush2.msra.mxu0 0.0
        %715 = vmatprep.subr.mxu0 0.0
        %716 = vmatpush2.msra.mxu0 0.0
        %717 = vmatprep.subr.mxu0 0.0
        %718 = vmatpush2.msra.mxu0 0.0
        %719 = vmatprep.subr.mxu0 0.0
        %720 = vmatpush2.msra.mxu0 0.0
        %721 = vmatprep.subr.mxu0 0.0
        %722 = vmatpush2.msra.mxu0 0.0
        %723 = vmatprep.subr.mxu0 0.0
        %724 = vmatpush2.msra.mxu0 0.0
        %725 = vmatprep.subr.mxu0 0.0
        %726 = vmatpush2.msra.mxu0 0.0
        %727 = vmatprep.subr.mxu0 0.0
        %728 = vmatpush2.msra.mxu0 0.0
        %729 = vmatprep.subr.mxu0 0.0
        %730 = vmatpush2.msra.mxu0 0.0
        %731 = vmatprep.subr.mxu0 0.0
        %732 = vmatpush2.msra.mxu0 0.0
        %733 = vmatprep.subr.mxu0 0.0
        %734 = vmatpush2.msra.mxu0 0.0
        %735 = vmatprep.subr.mxu0 0.0
        %736 = vmatpush2.msra.mxu0 0.0
        %737 = vmatprep.subr.mxu0 0.0
        %738 = vmatpush2.msra.mxu0 0.0
        %739 = vmatprep.subr.mxu0 0.0
        %740 = vmatpush2.msra.mxu0 0.0
        %741 = vmatprep.mubr.f32.mxu0 0.0
        %742 = vmatmul.mubr.f32.gmra.mxu0 %v675
        %v743 = vpop.f32.mrf.mxu0
        %v744 = vadd.f32 %v470, %v743
        %v745 = vpop.f32.mrf.mxu0
        %746 = vdwg.mxu0
        %v747 = vmax.f32 %v744, 0.0
        %v748 = vld [vmem:[%s304] sm:$0xff]
        %v749 = vadd.f32 %v747, %v748
        %v750 = vld [vmem:[%s4] sm:$0xff]
        %v751 = vld [vmem:[%s4 + $0x8] sm:$0xff]
        %v752 = vld [vmem:[%s4 + $0x10] sm:$0xff]
        %v753 = vld [vmem:[%s4 + $0x18] sm:$0xff]
        %v754 = vld [vmem:[%s5] sm:$0xff]
        %v755 = vld [vmem:[%s5 + $0x8] sm:$0xff]
        %v756 = vld [vmem:[%s5 + $0x10] sm:$0xff]
        %v757 = vld [vmem:[%s5 + $0x18] sm:$0xff]
        %759 = vset.pattern.permute.xlu0 0
        %760 = vperm.xlu0 %759, %v754
        %v761 = vpop.permute.xlu0 %760
        %764 = vset.pattern.permute.xlu0 0
        %765 = vperm.xlu0 %764, %v755
        %v766 = vpop.permute.xlu0 %765
        %769 = vset.pattern.permute.xlu0 0
        %770 = vperm.xlu0 %769, %v756
        %v771 = vpop.permute.xlu0 %770
        %774 = vset.pattern.permute.xlu0 0
        %775 = vperm.xlu0 %774, %v757
        %v776 = vpop.permute.xlu0 %775
        %vm778 = vcmask 64512
        %v780 = vsel %vm778, %v750, 0
        %v783 = vsel %vm778, %v751, 0
        %v786 = vsel %vm778, %v752, 0
        %v789 = vsel %vm778, %v753, 0
        %791 = vmatprep.subr.mxu0 0.0
        %792 = vmatpush1.msra.mxu0 0.0
        %793 = vmatprep.subr.mxu0 0.0
        %794 = vmatpush1.msra.mxu0 0.0
        %795 = vmatprep.subr.mxu0 0.0
        %796 = vmatpush1.msra.mxu0 0.0
        %797 = vmatprep.subr.mxu0 0.0
        %798 = vmatpush1.msra.mxu0 0.0
        %799 = vmatprep.subr.mxu0 0.0
        %800 = vmatpush1.msra.mxu0 0.0
        %801 = vmatprep.subr.mxu0 0.0
        %802 = vmatpush1.msra.mxu0 0.0
        %803 = vmatprep.subr.mxu0 0.0
        %804 = vmatpush1.msra.mxu0 0.0
        %805 = vmatprep.subr.mxu0 0.0
        %806 = vmatpush1.msra.mxu0 0.0
        %807 = vmatprep.subr.mxu0 0.0
        %808 = vmatpush1.msra.mxu0 0.0
        %809 = vmatprep.subr.mxu0 0.0
        %810 = vmatpush1.msra.mxu0 0.0
        %811 = vmatprep.subr.mxu0 0.0
        %812 = vmatpush1.msra.mxu0 0.0
        %813 = vmatprep.subr.mxu0 0.0
        %814 = vmatpush1.msra.mxu0 0.0
        %815 = vmatprep.subr.mxu0 0.0
        %816 = vmatpush1.msra.mxu0 0.0
        %817 = vmatprep.subr.mxu0 0.0
        %818 = vmatpush1.msra.mxu0 0.0
        %819 = vmatprep.subr.mxu0 0.0
        %820 = vmatpush1.msra.mxu0 0.0
        %821 = vmatprep.subr.mxu0 0.0
        %822 = vmatpush1.msra.mxu0 %v749
        %823 = vmatprep.subr.mxu0 0.0
        %824 = vmatpush2.msra.mxu0 0.0
        %825 = vmatprep.subr.mxu0 0.0
        %826 = vmatpush2.msra.mxu0 0.0
        %827 = vmatprep.subr.mxu0 0.0
        %828 = vmatpush2.msra.mxu0 0.0
        %829 = vmatprep.subr.mxu0 0.0
        %830 = vmatpush2.msra.mxu0 0.0
        %831 = vmatprep.subr.mxu0 0.0
        %832 = vmatpush2.msra.mxu0 0.0
        %833 = vmatprep.subr.mxu0 0.0
        %834 = vmatpush2.msra.mxu0 0.0
        %835 = vmatprep.subr.mxu0 0.0
        %836 = vmatpush2.msra.mxu0 0.0
        %837 = vmatprep.subr.mxu0 0.0
        %838 = vmatpush2.msra.mxu0 0.0
        %839 = vmatprep.subr.mxu0 0.0
        %840 = vmatpush2.msra.mxu0 0.0
        %841 = vmatprep.subr.mxu0 0.0
        %842 = vmatpush2.msra.mxu0 0.0
        %843 = vmatprep.subr.mxu0 0.0
        %844 = vmatpush2.msra.mxu0 0.0
        %845 = vmatprep.subr.mxu0 0.0
        %846 = vmatpush2.msra.mxu0 0.0
        %847 = vmatprep.subr.mxu0 0.0
        %848 = vmatpush2.msra.mxu0 0.0
        %849 = vmatprep.subr.mxu0 0.0
        %850 = vmatpush2.msra.mxu0 0.0
        %851 = vmatprep.subr.mxu0 0.0
        %852 = vmatpush2.msra.mxu0 0.0
        %853 = vmatprep.subr.mxu0 0.0
        %854 = vmatpush2.msra.mxu0 0.0
        %855 = vmatprep.mubr.f32.mxu0 0.0
        %856 = vmatmul.mubr.f32.gmra.mxu0 %v780
        %v857 = vpop.f32.mrf.mxu0
        %v858 = vadd.f32 %v761, %v857
        %v859 = vpop.f32.mrf.mxu0
        %860 = vmatprep.mubr.f32.mxu0 0.0
        %861 = vmatmul.mubr.f32.gmra.mxu0 %v783
        %v862 = vpop.f32.mrf.mxu0
        %v863 = vadd.f32 %v766, %v862
        %v864 = vpop.f32.mrf.mxu0
        %865 = vmatprep.mubr.f32.mxu0 0.0
        %866 = vmatmul.mubr.f32.gmra.mxu0 %v786
        %v867 = vpop.f32.mrf.mxu0
        %v868 = vadd.f32 %v771, %v867
        %v869 = vpop.f32.mrf.mxu0
        %870 = vmatprep.mubr.f32.mxu0 0.0
        %871 = vmatmul.mubr.f32.gmra.mxu0 %v789
        %v872 = vpop.f32.mrf.mxu0
        %v873 = vadd.f32 %v776, %v872
        %v874 = vpop.f32.mrf.mxu0
        %875 = vdwg.mxu0
        %v876 = vxor.u32 %v858, 2147483648
        %v877 = vxor.u32 %v863, 2147483648
        %v878 = vxor.u32 %v868, 2147483648
        %v879 = vxor.u32 %v873, 2147483648
        %v880 = vmul.f32 %v876, 1.442695
        %v881 = vpow.pop %v880
        %v882 = vmul.f32 %v877, 1.442695
        %v883 = vpow.pop %v882
        %v884 = vmul.f32 %v878, 1.442695
        %v885 = vpow.pop %v884
        %v886 = vmul.f32 %v879, 1.442695
        %v887 = vpow.pop %v886
        %v888 = vadd.f32 %v881, 1.0
        %v889 = vadd.f32 %v883, 1.0
        %v890 = vadd.f32 %v885, 1.0
        %v891 = vadd.f32 %v887, 1.0
        %v892 = vrcp.pop %v888
        %v893 = vmul.f32 1.0, %v892
        %v894 = vrcp.pop %v889
        %v895 = vmul.f32 1.0, %v894
        %v896 = vrcp.pop %v890
        %v897 = vmul.f32 1.0, %v896
        %v898 = vrcp.pop %v891
        %v899 = vmul.f32 1.0, %v898
        %v900 = vlaneseq
        %v901 = vshrl.u32 %v900, 7
        %v902 = vsub.s32 0, %v901
        %v903 = vrot.slane %v893, %v902
        %905 = vbcast.lane.b32.xlu0 %v903, 256
        %v906 = vpop.permute.xlu0 %905
        %v907 = vlaneseq
        %v908 = vshrl.u32 %v907, 7
        %v909 = vsub.s32 1, %v908
        %v910 = vrot.slane %v893, %v909
        %912 = vbcast.lane.b32.xlu0 %v910, 256
        %v913 = vpop.permute.xlu0 %912
        %v914 = vlaneseq
        %v915 = vshrl.u32 %v914, 7
        %v916 = vsub.s32 2, %v915
        %v917 = vrot.slane %v893, %v916
        %919 = vbcast.lane.b32.xlu0 %v917, 256
        %v920 = vpop.permute.xlu0 %919
        %v921 = vlaneseq
        %v922 = vshrl.u32 %v921, 7
        %v923 = vsub.s32 3, %v922
        %v924 = vrot.slane %v893, %v923
        %926 = vbcast.lane.b32.xlu0 %v924, 256
        %v927 = vpop.permute.xlu0 %926
        %v928 = vlaneseq
        %v929 = vshrl.u32 %v928, 7
        %v930 = vsub.s32 4, %v929
        %v931 = vrot.slane %v893, %v930
        %933 = vbcast.lane.b32.xlu0 %v931, 256
        %v934 = vpop.permute.xlu0 %933
        %v935 = vlaneseq
        %v936 = vshrl.u32 %v935, 7
        %v937 = vsub.s32 5, %v936
        %v938 = vrot.slane %v893, %v937
        %940 = vbcast.lane.b32.xlu0 %v938, 256
        %v941 = vpop.permute.xlu0 %940
        %v942 = vlaneseq
        %v943 = vshrl.u32 %v942, 7
        %v944 = vsub.s32 6, %v943
        %v945 = vrot.slane %v893, %v944
        %947 = vbcast.lane.b32.xlu0 %v945, 256
        %v948 = vpop.permute.xlu0 %947
        %v949 = vlaneseq
        %v950 = vshrl.u32 %v949, 7
        %v951 = vsub.s32 7, %v950
        %v952 = vrot.slane %v893, %v951
        %954 = vbcast.lane.b32.xlu0 %v952, 256
        %v955 = vpop.permute.xlu0 %954
        %v956 = vlaneseq
        %v957 = vshrl.u32 %v956, 7
        %v958 = vsub.s32 0, %v957
        %v959 = vrot.slane %v895, %v958
        %961 = vbcast.lane.b32.xlu0 %v959, 256
        %v962 = vpop.permute.xlu0 %961
        %v963 = vlaneseq
        %v964 = vshrl.u32 %v963, 7
        %v965 = vsub.s32 1, %v964
        %v966 = vrot.slane %v895, %v965
        %968 = vbcast.lane.b32.xlu0 %v966, 256
        %v969 = vpop.permute.xlu0 %968
        %v970 = vlaneseq
        %v971 = vshrl.u32 %v970, 7
        %v972 = vsub.s32 2, %v971
        %v973 = vrot.slane %v895, %v972
        %975 = vbcast.lane.b32.xlu0 %v973, 256
        %v976 = vpop.permute.xlu0 %975
        %v977 = vlaneseq
        %v978 = vshrl.u32 %v977, 7
        %v979 = vsub.s32 3, %v978
        %v980 = vrot.slane %v895, %v979
        %982 = vbcast.lane.b32.xlu0 %v980, 256
        %v983 = vpop.permute.xlu0 %982
        %v984 = vlaneseq
        %v985 = vshrl.u32 %v984, 7
        %v986 = vsub.s32 4, %v985
        %v987 = vrot.slane %v895, %v986
        %989 = vbcast.lane.b32.xlu0 %v987, 256
        %v990 = vpop.permute.xlu0 %989
        %v991 = vlaneseq
        %v992 = vshrl.u32 %v991, 7
        %v993 = vsub.s32 5, %v992
        %v994 = vrot.slane %v895, %v993
        %996 = vbcast.lane.b32.xlu0 %v994, 256
        %v997 = vpop.permute.xlu0 %996
        %v998 = vlaneseq
        %v999 = vshrl.u32 %v998, 7
        %v1000 = vsub.s32 6, %v999
        %v1001 = vrot.slane %v895, %v1000
        %1003 = vbcast.lane.b32.xlu0 %v1001, 256
        %v1004 = vpop.permute.xlu0 %1003
        %v1005 = vlaneseq
        %v1006 = vshrl.u32 %v1005, 7
        %v1007 = vsub.s32 7, %v1006
        %v1008 = vrot.slane %v895, %v1007
        %1010 = vbcast.lane.b32.xlu0 %v1008, 256
        %v1011 = vpop.permute.xlu0 %1010
        %v1012 = vlaneseq
        %v1013 = vshrl.u32 %v1012, 7
        %v1014 = vsub.s32 0, %v1013
        %v1015 = vrot.slane %v897, %v1014
        %1017 = vbcast.lane.b32.xlu0 %v1015, 256
        %v1018 = vpop.permute.xlu0 %1017
        %v1019 = vlaneseq
        %v1020 = vshrl.u32 %v1019, 7
        %v1021 = vsub.s32 1, %v1020
        %v1022 = vrot.slane %v897, %v1021
        %1024 = vbcast.lane.b32.xlu0 %v1022, 256
        %v1025 = vpop.permute.xlu0 %1024
        %v1026 = vlaneseq
        %v1027 = vshrl.u32 %v1026, 7
        %v1028 = vsub.s32 2, %v1027
        %v1029 = vrot.slane %v897, %v1028
        %1031 = vbcast.lane.b32.xlu0 %v1029, 256
        %v1032 = vpop.permute.xlu0 %1031
        %v1033 = vlaneseq
        %v1034 = vshrl.u32 %v1033, 7
        %v1035 = vsub.s32 3, %v1034
        %v1036 = vrot.slane %v897, %v1035
        %1038 = vbcast.lane.b32.xlu0 %v1036, 256
        %v1039 = vpop.permute.xlu0 %1038
        %v1040 = vlaneseq
        %v1041 = vshrl.u32 %v1040, 7
        %v1042 = vsub.s32 4, %v1041
        %v1043 = vrot.slane %v897, %v1042
        %1045 = vbcast.lane.b32.xlu0 %v1043, 256
        %v1046 = vpop.permute.xlu0 %1045
        %v1047 = vlaneseq
        %v1048 = vshrl.u32 %v1047, 7
        %v1049 = vsub.s32 5, %v1048
        %v1050 = vrot.slane %v897, %v1049
        %1052 = vbcast.lane.b32.xlu0 %v1050, 256
        %v1053 = vpop.permute.xlu0 %1052
        %v1054 = vlaneseq
        %v1055 = vshrl.u32 %v1054, 7
        %v1056 = vsub.s32 6, %v1055
        %v1057 = vrot.slane %v897, %v1056
        %1059 = vbcast.lane.b32.xlu0 %v1057, 256
        %v1060 = vpop.permute.xlu0 %1059
        %v1061 = vlaneseq
        %v1062 = vshrl.u32 %v1061, 7
        %v1063 = vsub.s32 7, %v1062
        %v1064 = vrot.slane %v897, %v1063
        %1066 = vbcast.lane.b32.xlu0 %v1064, 256
        %v1067 = vpop.permute.xlu0 %1066
        %v1068 = vlaneseq
        %v1069 = vshrl.u32 %v1068, 7
        %v1070 = vsub.s32 0, %v1069
        %v1071 = vrot.slane %v899, %v1070
        %1073 = vbcast.lane.b32.xlu0 %v1071, 256
        %v1074 = vpop.permute.xlu0 %1073
        %v1075 = vlaneseq
        %v1076 = vshrl.u32 %v1075, 7
        %v1077 = vsub.s32 1, %v1076
        %v1078 = vrot.slane %v899, %v1077
        %1080 = vbcast.lane.b32.xlu0 %v1078, 256
        %v1081 = vpop.permute.xlu0 %1080
        %v1082 = vlaneseq
        %v1083 = vshrl.u32 %v1082, 7
        %v1084 = vsub.s32 2, %v1083
        %v1085 = vrot.slane %v899, %v1084
        %1087 = vbcast.lane.b32.xlu0 %v1085, 256
        %v1088 = vpop.permute.xlu0 %1087
        %v1089 = vlaneseq
        %v1090 = vshrl.u32 %v1089, 7
        %v1091 = vsub.s32 3, %v1090
        %v1092 = vrot.slane %v899, %v1091
        %1094 = vbcast.lane.b32.xlu0 %v1092, 256
        %v1095 = vpop.permute.xlu0 %1094
        %v1096 = vlaneseq
        %v1097 = vshrl.u32 %v1096, 7
        %v1098 = vsub.s32 4, %v1097
        %v1099 = vrot.slane %v899, %v1098
        %1101 = vbcast.lane.b32.xlu0 %v1099, 256
        %v1102 = vpop.permute.xlu0 %1101
        %v1103 = vlaneseq
        %v1104 = vshrl.u32 %v1103, 7
        %v1105 = vsub.s32 5, %v1104
        %v1106 = vrot.slane %v899, %v1105
        %1108 = vbcast.lane.b32.xlu0 %v1106, 256
        %v1109 = vpop.permute.xlu0 %1108
        %v1110 = vlaneseq
        %v1111 = vshrl.u32 %v1110, 7
        %v1112 = vsub.s32 6, %v1111
        %v1113 = vrot.slane %v899, %v1112
        %1115 = vbcast.lane.b32.xlu0 %v1113, 256
        %v1116 = vpop.permute.xlu0 %1115
        %v1117 = vlaneseq
        %v1118 = vshrl.u32 %v1117, 7
        %v1119 = vsub.s32 7, %v1118
        %v1120 = vrot.slane %v899, %v1119
        %1122 = vbcast.lane.b32.xlu0 %v1120, 256
        %v1123 = vpop.permute.xlu0 %1122
        %v1124 = vmul.f32 %v305, %v906
        %v1125 = vmul.f32 %v306, %v906
        %v1126 = vmul.f32 %v307, %v913
        %v1127 = vmul.f32 %v308, %v913
        %v1128 = vmul.f32 %v309, %v920
        %v1129 = vmul.f32 %v310, %v920
        %v1130 = vmul.f32 %v311, %v927
        %v1131 = vmul.f32 %v312, %v927
        %v1132 = vmul.f32 %v313, %v934
        %v1133 = vmul.f32 %v314, %v934
        %v1134 = vmul.f32 %v315, %v941
        %v1135 = vmul.f32 %v316, %v941
        %v1136 = vmul.f32 %v317, %v948
        %v1137 = vmul.f32 %v318, %v948
        %v1138 = vmul.f32 %v319, %v955
        %v1139 = vmul.f32 %v320, %v955
        %v1140 = vmul.f32 %v321, %v962
        %v1141 = vmul.f32 %v322, %v962
        %v1142 = vmul.f32 %v323, %v969
        %v1143 = vmul.f32 %v324, %v969
        %v1144 = vmul.f32 %v325, %v976
        %v1145 = vmul.f32 %v326, %v976
        %v1146 = vmul.f32 %v327, %v983
        %v1147 = vmul.f32 %v328, %v983
        %v1148 = vmul.f32 %v329, %v990
        %v1149 = vmul.f32 %v330, %v990
        %v1150 = vmul.f32 %v331, %v997
        %v1151 = vmul.f32 %v332, %v997
        %v1152 = vmul.f32 %v333, %v1004
        %v1153 = vmul.f32 %v334, %v1004
        %v1154 = vmul.f32 %v335, %v1011
        %v1155 = vmul.f32 %v336, %v1011
        %v1156 = vmul.f32 %v337, %v1018
        %v1157 = vmul.f32 %v338, %v1018
        %v1158 = vmul.f32 %v339, %v1025
        %v1159 = vmul.f32 %v340, %v1025
        %v1160 = vmul.f32 %v341, %v1032
        %v1161 = vmul.f32 %v342, %v1032
        %v1162 = vmul.f32 %v343, %v1039
        %v1163 = vmul.f32 %v344, %v1039
        %v1164 = vmul.f32 %v345, %v1046
        %v1165 = vmul.f32 %v346, %v1046
        %v1166 = vmul.f32 %v347, %v1053
        %v1167 = vmul.f32 %v348, %v1053
        %v1168 = vmul.f32 %v349, %v1060
        %v1169 = vmul.f32 %v350, %v1060
        %v1170 = vmul.f32 %v351, %v1067
        %v1171 = vmul.f32 %v352, %v1067
        %v1172 = vmul.f32 %v353, %v1074
        %v1173 = vmul.f32 %v354, %v1074
        %v1174 = vmul.f32 %v355, %v1081
        %v1175 = vmul.f32 %v356, %v1081
        %v1176 = vmul.f32 %v357, %v1088
        %v1177 = vmul.f32 %v358, %v1088
        %v1178 = vmul.f32 %v359, %v1095
        %v1179 = vmul.f32 %v360, %v1095
        %v1180 = vmul.f32 %v361, %v1102
        %v1181 = vmul.f32 %v362, %v1102
        %v1182 = vmul.f32 %v363, %v1109
        %v1183 = vmul.f32 %v364, %v1109
        %v1184 = vmul.f32 %v365, %v1116
        %v1185 = vmul.f32 %v366, %v1116
        %v1186 = vmul.f32 %v367, %v1123
        %v1187 = vmul.f32 %v368, %v1123
        %1188 = vst [vmem:[%s300] sm:$0xff] %v1124
        %1189 = vst [vmem:[%s300 + $0x8] sm:$0xff] %v1125
        %1190 = vst [vmem:[%s300 + $0x10] sm:$0xff] %v1126
        %1191 = vst [vmem:[%s300 + $0x18] sm:$0xff] %v1127
        %1192 = vst [vmem:[%s300 + $0x20] sm:$0xff] %v1128
        %1193 = vst [vmem:[%s300 + $0x28] sm:$0xff] %v1129
        %1194 = vst [vmem:[%s300 + $0x30] sm:$0xff] %v1130
        %1195 = vst [vmem:[%s300 + $0x38] sm:$0xff] %v1131
        %1196 = vst [vmem:[%s300 + $0x40] sm:$0xff] %v1132
        %1197 = vst [vmem:[%s300 + $0x48] sm:$0xff] %v1133
        %1198 = vst [vmem:[%s300 + $0x50] sm:$0xff] %v1134
        %1199 = vst [vmem:[%s300 + $0x58] sm:$0xff] %v1135
        %1200 = vst [vmem:[%s300 + $0x60] sm:$0xff] %v1136
        %1201 = vst [vmem:[%s300 + $0x68] sm:$0xff] %v1137
        %1202 = vst [vmem:[%s300 + $0x70] sm:$0xff] %v1138
        %1203 = vst [vmem:[%s300 + $0x78] sm:$0xff] %v1139
        %1204 = vst [vmem:[%s300 + $0x80] sm:$0xff] %v1140
        %1205 = vst [vmem:[%s300 + $0x88] sm:$0xff] %v1141
        %1206 = vst [vmem:[%s300 + $0x90] sm:$0xff] %v1142
        %1207 = vst [vmem:[%s300 + $0x98] sm:$0xff] %v1143
        %1208 = vst [vmem:[%s300 + $0xa0] sm:$0xff] %v1144
        %1209 = vst [vmem:[%s300 + $0xa8] sm:$0xff] %v1145
        %1210 = vst [vmem:[%s300 + $0xb0] sm:$0xff] %v1146
        %1211 = vst [vmem:[%s300 + $0xb8] sm:$0xff] %v1147
        %1212 = vst [vmem:[%s300 + $0xc0] sm:$0xff] %v1148
        %1213 = vst [vmem:[%s300 + $0xc8] sm:$0xff] %v1149
        %1214 = vst [vmem:[%s300 + $0xd0] sm:$0xff] %v1150
        %1215 = vst [vmem:[%s300 + $0xd8] sm:$0xff] %v1151
        %1216 = vst [vmem:[%s300 + $0xe0] sm:$0xff] %v1152
        %1217 = vst [vmem:[%s300 + $0xe8] sm:$0xff] %v1153
        %1218 = vst [vmem:[%s300 + $0xf0] sm:$0xff] %v1154
        %1219 = vst [vmem:[%s300 + $0xf8] sm:$0xff] %v1155
        %1220 = vst [vmem:[%s300 + $0x100] sm:$0xff] %v1156
        %1221 = vst [vmem:[%s300 + $0x108] sm:$0xff] %v1157
        %1222 = vst [vmem:[%s300 + $0x110] sm:$0xff] %v1158
        %1223 = vst [vmem:[%s300 + $0x118] sm:$0xff] %v1159
        %1224 = vst [vmem:[%s300 + $0x120] sm:$0xff] %v1160
        %1225 = vst [vmem:[%s300 + $0x128] sm:$0xff] %v1161
        %1226 = vst [vmem:[%s300 + $0x130] sm:$0xff] %v1162
        %1227 = vst [vmem:[%s300 + $0x138] sm:$0xff] %v1163
        %1228 = vst [vmem:[%s300 + $0x140] sm:$0xff] %v1164
        %1229 = vst [vmem:[%s300 + $0x148] sm:$0xff] %v1165
        %1230 = vst [vmem:[%s300 + $0x150] sm:$0xff] %v1166
        %1231 = vst [vmem:[%s300 + $0x158] sm:$0xff] %v1167
        %1232 = vst [vmem:[%s300 + $0x160] sm:$0xff] %v1168
        %1233 = vst [vmem:[%s300 + $0x168] sm:$0xff] %v1169
        %1234 = vst [vmem:[%s300 + $0x170] sm:$0xff] %v1170
        %1235 = vst [vmem:[%s300 + $0x178] sm:$0xff] %v1171
        %1236 = vst [vmem:[%s300 + $0x180] sm:$0xff] %v1172
        %1237 = vst [vmem:[%s300 + $0x188] sm:$0xff] %v1173
        %1238 = vst [vmem:[%s300 + $0x190] sm:$0xff] %v1174
        %1239 = vst [vmem:[%s300 + $0x198] sm:$0xff] %v1175
        %1240 = vst [vmem:[%s300 + $0x1a0] sm:$0xff] %v1176
        %1241 = vst [vmem:[%s300 + $0x1a8] sm:$0xff] %v1177
        %1242 = vst [vmem:[%s300 + $0x1b0] sm:$0xff] %v1178
        %1243 = vst [vmem:[%s300 + $0x1b8] sm:$0xff] %v1179
        %1244 = vst [vmem:[%s300 + $0x1c0] sm:$0xff] %v1180
        %1245 = vst [vmem:[%s300 + $0x1c8] sm:$0xff] %v1181
        %1246 = vst [vmem:[%s300 + $0x1d0] sm:$0xff] %v1182
        %1247 = vst [vmem:[%s300 + $0x1d8] sm:$0xff] %v1183
        %1248 = vst [vmem:[%s300 + $0x1e0] sm:$0xff] %v1184
        %1249 = vst [vmem:[%s300 + $0x1e8] sm:$0xff] %v1185
        %1250 = vst [vmem:[%s300 + $0x1f0] sm:$0xff] %v1186
        %1251 = vst [vmem:[%s300 + $0x1f8] sm:$0xff] %v1187
        %s1252 = sand.u32 %s183, 1
        %s1253 = scalar_lea.sflag [#allocation4], %s1252
        %s1254 = sand.u32 %s183, 1
        %s1255 = smul.addr %s1254, 512
        %s1256 = scalar_lea.vmem [#allocation5], %s1255
        // Predicated region
        $region49: #{tpu_custom_call.1} parent=43 // pred_check
          %p1257 = pneg %p193
        $region50: #{tpu_custom_call.1} parent=43 // pred_check_branch
          %1259 = sbr.rel (%p1257) target = $region52
        $region51: #{tpu_custom_call.1} parent=43 // pred_region
          %s1261 = ssub.s32 8192, 8192
          %1262 = vsyncadd %s1253, %s1261
          %s1263 = smul.addr %s28, 2
          %s1264 = smul.addr %s27, 64
          %s1265 = sadd.s32 %s1263, %s1264
          %s1266 = smul.addr %s1265, 128
          %s1267 = scalar_lea.hbm %s6, %s1266
          %s1268 = sshll.u32 %s1256, 4
          %s1269 = int_to_ptr.vmem [resolvable:$true] %s1268
          %1274 = dma.vmem_to_hbm [thread:$0]  %s1269, 8192, %s1267, %s1253, 256, 256, 16
        $region52: #{tpu_custom_call.1} parent=43 // pred_fallthru
          _
      $region44: #{tpu_custom_call.1} parent=5 // pred_fallthru
        _
      %p1275 = scmp.le.s32.totalorder 2, %s18
      // Predicated region
      $region53: #{tpu_custom_call.1} parent=5 // pred_check
        %p1276 = pneg %p1275
      $region54: #{tpu_custom_call.1} parent=5 // pred_check_branch
        %1278 = sbr.rel (%p1276) target = $region56
      $region55: #{tpu_custom_call.1} parent=5 // pred_region
        %s1279 = ssub.s32 %s18, 2
        // Predicated region
        $region57: #{tpu_custom_call.1} parent=55 // pred_check
          %p1280 = pneg %p199
        $region58: #{tpu_custom_call.1} parent=55 // pred_check_branch
          %1282 = sbr.rel (%p1280) target = $region60
        $region59: #{tpu_custom_call.1} parent=55 // pred_region
          %s1283 = sand.u32 %s184, 1
          %s1284 = scalar_lea.sflag [#allocation4], %s1283
          %s1285 = sand.u32 %s184, 1
          %s1286 = smul.addr %s1285, 512
          %s1287 = scalar_lea.vmem [#allocation5], %s1286
          %1288 = dma.done %s1284, 8192
        $region60: #{tpu_custom_call.1} parent=55 // pred_fallthru
          _
      $region56: #{tpu_custom_call.1} parent=5 // pred_fallthru
        _
    $region6: #{tpu_custom_call.1} parent=1 // loop_footer
      %s22 = sadd.s32 1, %s18
    $region7: #{tpu_custom_call.1} parent=1 // loop_footer_branch
      %17 = sbr.rel target = $region3
    $region8: #{tpu_custom_call.1} parent=1 // loop_exit
      _
    %1289 = vsyncpa [#allocation3], 1
    %s1290 = scalar_lea.sflag [#allocation3], 1
    %1291 = vsyncpa %s1290, 1
    %1292 = vsyncpa [#allocation4], 1
    %s1293 = scalar_lea.sflag [#allocation4], 1
    %1294 = vsyncpa %s1293, 1

</llo_original>
